<compile_context>
chip_gen: v7x
topology: tpu7x:2x2x1
jax: 0.10.0
libtpu: 0.0.40
codegen_flags: <defaults>
</compile_context>

<pallas_src>
import jax
import jax.numpy as jnp
from jax import lax
from jax.experimental import pallas as pl
from jax.experimental.pallas import tpu as pltpu

_MiB = 1024 * 1024


def _vmem_plan():
    """Generation-aware (per-pipeline-buffer target bytes, vmem_limit_bytes)."""
    phys = 64 * _MiB                      # conservative default: v7x per-TC VMEM
    try:
        info = pltpu.get_tpu_info()
        v = int(getattr(info, "vmem_capacity_bytes", 0) or 0)
        if v > 0:
            phys = v
    except Exception:
        pass
    if phys >= 96 * _MiB:
        # v5e / v6e class (128 MiB physical). 4 MiB blocks are already at the measured
        # ~86%-of-roofline knee; the explicit limit matters on v5e (16 MiB scoped default).
        return 4 * _MiB, 80 * _MiB
    # v7x class (64 MiB per TensorCore): keep pipeline + f32 temporaries well inside it.
    return 2 * _MiB, 48 * _MiB


def _choose_batch_tile(n_rows, width, itemsize, target_bytes, align):
    # Cap the tile by BYTES per buffer, not by a fixed row count.
    tb = target_bytes // max(1, width * itemsize)
    tb = max(align, (int(tb) // align) * align)
    if n_rows <= tb:
        return n_rows                      # full-dim block (exempt from 8-divisibility)
    return tb


def _make_kernel(alpha, beta, epsilon, n_rows, total_batch, TB, W, seg_l1, needs_mask,
                 vector_acc):
    inv_b = 1.0 / float(total_batch)
    eps = float(epsilon)

    def loss_terms(x, t, s):
        """x, t: [TB, W] f32 (already masked if needed). Returns elementwise loss term."""
        elem = jnp.zeros(x.shape, jnp.float32)
        if alpha != 0.0:
            xc = jnp.clip(x, eps, 1.0 - eps)
            elem = elem - alpha * (t * jnp.log(xc))
        if beta != 0.0:
            ta = jnp.abs(t)
            if seg_l1:
                # Per-original-row (segment) L1, already broadcast per element, via the
                # block-diagonal ones matrix on the MXU (f32 acc, HIGHEST precision).
                l1 = jnp.dot(ta, s, preferred_element_type=jnp.float32,
                             precision=lax.Precision.HIGHEST)
            else:
                l1 = jnp.sum(ta, axis=-1, keepdims=True)       # [TB, 1]
            inv_l1 = 1.0 / jnp.maximum(l1, 1e-12)              # exact (no approx recip)
            tn = jnp.clip(t * inv_l1, eps, 1.0 - eps)
            elem = elem - beta * (x * jnp.log(tn))
        return elem

    def kernel(*refs):
        if seg_l1:
            x_ref, t_ref, s_ref, out_ref, acc_ref = refs
        else:
            x_ref, t_ref, out_ref, acc_ref = refs
            s_ref = None
        i = pl.program_id(0)
        last = pl.num_programs(0) - 1

        @pl.when(i == 0)
        def _init():
            if vector_acc:
                acc_ref[...] = jnp.zeros_like(acc_ref)
            else:
                acc_ref[0] = jnp.float32(0.0)

        # Upcast BEFORE clip/log to keep parity with the f32 PyTorch reference.
        x = x_ref[...].astype(jnp.float32)
        t = t_ref[...].astype(jnp.float32)
        s = s_ref[...] if seg_l1 else None

        def accumulate(xv, tv):
            elem = loss_terms(xv, tv, s)
            if vector_acc:
                # Grouped row-sum: [TB, W] -> [TB//8, 8, W] is a free (layout-preserving)
                # reshape; the sum over axis 0 is plain vreg adds on the VPU.
                acc_ref[...] += jnp.sum(elem.reshape(TB // 8, 8, W), axis=0)
            else:
                acc_ref[0] += jnp.sum(elem)

        if needs_mask:
            # Only the ragged LAST tile pays for the row mask; hot tiles stay clean.
            @pl.when(i < last)
            def _hot():
                accumulate(x, t)

            @pl.when(i == last)
            def _ragged():
                rows = i * TB + lax.broadcasted_iota(jnp.int32, x.shape, 0)
                valid = rows < n_rows
                # Mask BEFORE clip/log: zeroed rows contribute exactly 0 to both terms.
                accumulate(jnp.where(valid, x, 0.0), jnp.where(valid, t, 0.0))
        else:
            accumulate(x, t)

        @pl.when(i == last)
        def _finalize():
            total = jnp.sum(acc_ref[...]) if vector_acc else acc_ref[0]
            out_ref[0, 0] = total * inv_b          # written exactly once

    return kernel


def proportion_loss(inputs, targets, mode="sce", alpha=1.0, beta=1.0, epsilon=1e-8,
                    batch_tile=None):
    """Scalar CE / RCE / SCE proportion loss as a batch-tiled Pallas streaming reduce.

    inputs, targets: [batch, num_classes]; any float dtype (bf16 halves HBM traffic,
    the f32 upcast happens inside the kernel).  `batch_tile`, if given, is in rows of
    the (possibly lane-packed) layout and should be a multiple of 8 (f32) / 16 (bf16)
    unless it covers the full batch.
    """
    assert inputs.shape == targets.shape and inputs.ndim == 2
    B, C = inputs.shape

    # Fold the mode into the two weights (same arithmetic as the PyTorch branches).
    if mode == "ce":
        a, b = 1.0, 0.0
    elif mode == "rce":
        a, b = 0.0, 1.0
    elif mode == "sce":
        a, b = float(alpha), float(beta)
    else:
        raise ValueError("mode must be 'ce', 'rce' or 'sce'.")

    # Lane packing (free, contiguous wrapper-side reshape) when C under-fills the lanes.
    k = 128 // C if (C < 128 and 128 % C == 0) else 1
    packed = (k > 1) and (B % k == 0) and ((B // k) % 8 == 0)
    if not packed:
        k = 1
    # TODO(synk): batches with B % (8 * 128 // C) != 0 fall back to the unpacked layout;
    # a packed main body plus a small unpacked remainder would recover the win there.

    x2 = inputs.reshape(B // k, k * C) if packed else inputs
    t2 = targets.reshape(B // k, k * C) if packed else targets
    n_rows, W = x2.shape

    itemsizes = (jnp.dtype(inputs.dtype).itemsize, jnp.dtype(targets.dtype).itemsize)
    align = max(8, 32 // min(itemsizes))          # sublane alignment: 8 (f32) / 16 (bf16)
    per_buffer_bytes, vmem_limit = _vmem_plan()

    # Budget tiles in f32-equivalent bytes of the lane-PADDED width so both pipeline
    # buffers and in-kernel f32 temporaries stay inside the VMEM plan.
    w_pad = ((W + 127) // 128) * 128
    if batch_tile is not None:
        TB = min(int(batch_tile), n_rows)
        if TB < n_rows:
            TB = max(align, (TB // align) * align)
    else:
        TB = _choose_batch_tile(n_rows, w_pad, 4, per_buffer_bytes, align)

    nt = int(pl.cdiv(n_rows, TB))
    needs_mask = nt * TB > n_rows                 # only the last tile can be ragged
    vector_acc = (TB % 8) == 0
    seg_l1 = packed and (b != 0.0)

    kernel = _make_kernel(a, b, float(epsilon), n_rows, B, TB, W, seg_l1, needs_mask,
                          vector_acc)

    in_specs = [pl.BlockSpec((TB, W), lambda i: (i, 0)),     # inputs tile (full width)
                pl.BlockSpec((TB, W), lambda i: (i, 0))]     # targets tile
    operands = [x2, t2]
    if seg_l1:
        # [W, W] block-diagonal ones (C x C blocks); constant block index -> DMA'd once.
        seg = jnp.arange(W, dtype=jnp.int32) // C
        s_mat = (seg[:, None] == seg[None, :]).astype(jnp.float32)
        in_specs.append(pl.BlockSpec((W, W), lambda i: (0, 0)))
        operands.append(s_mat)

    scratch = [pltpu.VMEM((8, W), jnp.float32) if vector_acc
               else pltpu.SMEM((1,), jnp.float32)]

    out = pl.pallas_call(
        kernel,
        out_shape=jax.ShapeDtypeStruct((1, 1), jnp.float32),
        grid_spec=pltpu.PrefetchScalarGridSpec(
            num_scalar_prefetch=0,
            grid=(nt,),
            in_specs=in_specs,
            out_specs=pl.BlockSpec((1, 1), lambda i: (0, 0),
                                   memory_space=pltpu.SMEM),
            scratch_shapes=scratch,
        ),
        compiler_params=pltpu.CompilerParams(
            dimension_semantics=("arbitrary",),   # accumulator carried across tiles
            vmem_limit_bytes=int(vmem_limit)),
    )(*operands)

    return out[0, 0]


def _proportion_loss_ref(inputs, targets, alpha=1.0, beta=1.0, epsilon=1e-8):
    """Pure-JAX reference mirroring the PyTorch forward (mode='sce')."""
    x = inputs.astype(jnp.float32)
    t = targets.astype(jnp.float32)
    xc = jnp.clip(x, epsilon, 1.0 - epsilon)
    ce = jnp.mean(-jnp.sum(t * jnp.log(xc), axis=-1))
    l1 = jnp.maximum(jnp.sum(jnp.abs(t), axis=-1, keepdims=True), 1e-12)
    tn = jnp.clip(t / l1, epsilon, 1.0 - epsilon)
    rce = jnp.mean(-jnp.sum(x * jnp.log(tn), axis=-1))
    return alpha * ce + beta * rce


if __name__ == "__main__":
    key = jax.random.PRNGKey(0)
    ks = jax.random.split(key, 6)

    # Case 1: tiny single-tile case (B=8, C=32), f32 (too small to pack -> unpacked,
    # full-dim block, vector accumulator).
    B1, C1 = 8, 32
    x1 = jax.nn.softmax(jax.random.normal(ks[0], (B1, C1), jnp.float32), axis=-1)
    t1 = jax.nn.softmax(jax.random.normal(ks[1], (B1, C1), jnp.float32), axis=-1)
    out1 = jax.block_until_ready(proportion_loss(x1, t1, mode="sce"))
    ref1 = _proportion_loss_ref(x1, t1)
    assert jnp.allclose(out1, ref1, rtol=1e-5, atol=1e-5), (out1, ref1)

    # Case 2: ragged multi-tile unpacked batch (B=37, tile=8) -> pipelined, pl.when-gated
    # last-tile mask, vector accumulator.  Also the no-tile (full-block, scalar-SMEM
    # accumulator) path on the same data.
    B2, C2 = 37, 32
    x2 = jax.nn.softmax(jax.random.normal(ks[2], (B2, C2), jnp.float32), axis=-1)
    t2 = jax.nn.softmax(jax.random.normal(ks[3], (B2, C2), jnp.float32), axis=-1)
    ref2 = _proportion_loss_ref(x2, t2)
    out2 = jax.block_until_ready(proportion_loss(x2, t2, batch_tile=8))
    assert jnp.allclose(out2, ref2, rtol=1e-5, atol=1e-5), (out2, ref2)
    out2b = jax.block_until_ready(proportion_loss(x2, t2))
    assert jnp.allclose(out2b, ref2, rtol=1e-5, atol=1e-5), (out2b, ref2)

    # Case 3: lane-packed path (C=32 -> [B/4, 128]) with the MXU block-diagonal
    # segment-L1; multi-tile + ragged last tile (batch_tile=96), and default tiling.
    B3, C3 = 1024, 32
    x3 = jax.nn.softmax(jax.random.normal(ks[4], (B3, C3), jnp.float32), axis=-1)
    t3 = jax.nn.softmax(jax.random.normal(ks[5], (B3, C3), jnp.float32), axis=-1)
    ref3 = _proportion_loss_ref(x3, t3)
    out3 = jax.block_until_ready(proportion_loss(x3, t3, batch_tile=96))
    assert jnp.allclose(out3, ref3, rtol=1e-4, atol=1e-5), (out3, ref3)
    out3b = jax.block_until_ready(proportion_loss(x3, t3))
    assert jnp.allclose(out3b, ref3, rtol=1e-4, atol=1e-5), (out3b, ref3)

    # Case 4: bf16 inputs (half the HBM traffic); in-kernel upcast before clip/log.
    out4 = jax.block_until_ready(
        proportion_loss(x3.astype(jnp.bfloat16), t3.astype(jnp.bfloat16)))
    ref4 = _proportion_loss_ref(x3.astype(jnp.bfloat16), t3.astype(jnp.bfloat16))
    assert jnp.allclose(out4, ref4, rtol=2e-2, atol=2e-2), (out4, ref4)

    # Case 5: 'ce' and 'rce' modes compose to the 'sce' result (alpha=beta=1).
    out_ce = jax.block_until_ready(proportion_loss(x1, t1, mode="ce"))
    out_rce = jax.block_until_ready(proportion_loss(x1, t1, mode="rce"))
    assert jnp.allclose(out_ce + out_rce, ref1, rtol=1e-5, atol=1e-5), (out_ce, out_rce, ref1)

    print("KERNEL_OK")
</pallas_src>

<mosaic_0001>
module attributes {stable_mosaic.version = 11 : i64} {
  func.func @kernel(%arg0: i32, %arg1: memref<8x32xf32, #tpu.memory_space<vmem>>, %arg2: memref<8x32xf32, #tpu.memory_space<vmem>>, %arg3: memref<1x1xf32, #tpu.memory_space<smem>>, %arg4: memref<8x32xf32, #tpu.memory_space<vmem>>) attributes {dimension_semantics = [#tpu.dimension_semantics<arbitrary>], iteration_bounds = array<i64: 1>, scalar_prefetch = 0 : i64, scratch_operands = 1 : i64, tpu.core_type = #tpu.core_type<tc>, window_params = [{transform_indices = @transform_0, window_bounds = array<i64: 8, 32>}, {transform_indices = @transform_1, window_bounds = array<i64: 8, 32>}, {transform_indices = @transform_2, window_bounds = array<i64: 1, 1>}]} {
    %c0_i32 = arith.constant 0 : i32
    %0 = arith.cmpi eq, %arg0, %c0_i32 : i32
    %1 = arith.extui %0 : i1 to i32
    %c0_i32_0 = arith.constant 0 : i32
    %2 = arith.cmpi ne, %1, %c0_i32_0 : i32
    scf.if %2 {
      %cst_20 = arith.constant 0.000000e+00 : f32
      %41 = vector.broadcast %cst_20 : f32 to vector<8x32xf32>
      %c0_21 = arith.constant 0 : index
      %c0_22 = arith.constant 0 : index
      %42 = vector.load %arg4[%c0_21, %c0_22] : memref<8x32xf32, #tpu.memory_space<vmem>>, vector<8x32xf32>
      tpu.vector_store %arg4[%c0_21, %c0_22], %41 {strides = array<i32>} : memref<8x32xf32, #tpu.memory_space<vmem>>, vector<8x32xf32>,
    } else {
    }
    %c0 = arith.constant 0 : index
    %c0_1 = arith.constant 0 : index
    %3 = vector.load %arg1[%c0, %c0_1] : memref<8x32xf32, #tpu.memory_space<vmem>>, vector<8x32xf32>
    %c0_2 = arith.constant 0 : index
    %c0_3 = arith.constant 0 : index
    %4 = vector.load %arg2[%c0_2, %c0_3] : memref<8x32xf32, #tpu.memory_space<vmem>>, vector<8x32xf32>
    %cst = arith.constant 0.000000e+00 : f32
    %5 = vector.broadcast %cst : f32 to vector<8x32xf32>
    %cst_4 = arith.constant 9.99999993E-9 : f32
    %cst_5 = arith.constant 1.000000e+00 : f32
    %6 = vector.broadcast %cst_4 : f32 to vector<8x32xf32>
    %7 = arith.maximumf %6, %3 : vector<8x32xf32>
    %8 = vector.broadcast %cst_5 : f32 to vector<8x32xf32>
    %9 = arith.minimumf %8, %7 : vector<8x32xf32>
    %10 = math.log %9 : vector<8x32xf32>
    %11 = arith.mulf %4, %10 : vector<8x32xf32>
    %cst_6 = arith.constant 1.000000e+00 : f32
    %12 = vector.broadcast %cst_6 : f32 to vector<8x32xf32>
    %13 = arith.mulf %12, %11 : vector<8x32xf32>
    %14 = arith.subf %5, %13 : vector<8x32xf32>
    %15 = math.absf %4 : vector<8x32xf32>
    %cst_7 = arith.constant dense<0.000000e+00> : vector<8xf32>
    %16 = vector.multi_reduction <add>, %15, %cst_7 [1] : vector<8x32xf32> to vector<8xf32>
    %17 = vector.shape_cast %16 : vector<8xf32> to vector<8x1xf32>
    %cst_8 = arith.constant 9.99999996E-13 : f32
    %18 = vector.broadcast %cst_8 : f32 to vector<8x1xf32>
    %19 = arith.maximumf %17, %18 : vector<8x1xf32>
    %cst_9 = arith.constant 1.000000e+00 : f32
    %20 = vector.broadcast %cst_9 : f32 to vector<8x1xf32>
    %21 = arith.divf %20, %19 : vector<8x1xf32>
    %22 = vector.broadcast %21 : vector<8x1xf32> to vector<8x32xf32>
    %23 = arith.mulf %4, %22 : vector<8x32xf32>
    %cst_10 = arith.constant 9.99999993E-9 : f32
    %cst_11 = arith.constant 1.000000e+00 : f32
    %24 = vector.broadcast %cst_10 : f32 to vector<8x32xf32>
    %25 = arith.maximumf %24, %23 : vector<8x32xf32>
    %26 = vector.broadcast %cst_11 : f32 to vector<8x32xf32>
    %27 = arith.minimumf %26, %25 : vector<8x32xf32>
    %28 = math.log %27 : vector<8x32xf32>
    %29 = arith.mulf %3, %28 : vector<8x32xf32>
    %cst_12 = arith.constant 1.000000e+00 : f32
    %30 = vector.broadcast %cst_12 : f32 to vector<8x32xf32>
    %31 = arith.mulf %30, %29 : vector<8x32xf32>
    %32 = arith.subf %14, %31 : vector<8x32xf32>
    %c0_13 = arith.constant 0 : index
    %c0_14 = arith.constant 0 : index
    %33 = vector.load %arg4[%c0_13, %c0_14] : memref<8x32xf32, #tpu.memory_space<vmem>>, vector<8x32xf32>
    %34 = vector.shape_cast %32 : vector<8x32xf32> to vector<1x8x32xf32>
    %cst_15 = arith.constant dense<0.000000e+00> : vector<8x32xf32>
    %35 = vector.multi_reduction <add>, %34, %cst_15 [0] : vector<1x8x32xf32> to vector<8x32xf32>
    %36 = arith.addf %33, %35 : vector<8x32xf32>
    %c0_16 = arith.constant 0 : index
    %c0_17 = arith.constant 0 : index
    %37 = vector.load %arg4[%c0_16, %c0_17] : memref<8x32xf32, #tpu.memory_space<vmem>>, vector<8x32xf32>
    tpu.vector_store %arg4[%c0_16, %c0_17], %36 {strides = array<i32>} : memref<8x32xf32, #tpu.memory_space<vmem>>, vector<8x32xf32>,
    %c0_i32_18 = arith.constant 0 : i32
    %38 = arith.cmpi eq, %arg0, %c0_i32_18 : i32
    %39 = arith.extui %38 : i1 to i32
    %c0_i32_19 = arith.constant 0 : i32
    %40 = arith.cmpi ne, %39, %c0_i32_19 : i32
    scf.if %40 {
      %c0_20 = arith.constant 0 : index
      %c0_21 = arith.constant 0 : index
      %41 = vector.load %arg4[%c0_20, %c0_21] : memref<8x32xf32, #tpu.memory_space<vmem>>, vector<8x32xf32>
      %42 = vector.shape_cast %41 : vector<8x32xf32> to vector<1x8x32xf32>
      %cst_22 = arith.constant dense<0.000000e+00> : vector<1xf32>
      %43 = vector.multi_reduction <add>, %42, %cst_22 [1, 2] : vector<1x8x32xf32> to vector<1xf32>
      %44 = vector.shape_cast %43 : vector<1xf32> to vector<1x1x1xf32>
      %45 = vector.extract %44[0, 0, 0] : f32 from vector<1x1x1xf32>
      %cst_23 = arith.constant 1.250000e-01 : f32
      %46 = arith.mulf %45, %cst_23 : f32
      %c0_24 = arith.constant 0 : index
      %c0_25 = arith.constant 0 : index
      %47 = memref.load %arg3[%c0_24, %c0_25] : memref<1x1xf32, #tpu.memory_space<smem>>
      memref.store %46, %arg3[%c0_24, %c0_25] : memref<1x1xf32, #tpu.memory_space<smem>>
    } else {
    }
    return
  }
  func.func @transform_0(%arg0: i32) -> (i32, i32) {
    %c0_i32 = arith.constant 0 : i32
    %c0_i32_0 = arith.constant 0 : i32
    return %arg0, %c0_i32 : i32, i32
  }
  func.func @transform_1(%arg0: i32) -> (i32, i32) {
    %c0_i32 = arith.constant 0 : i32
    %c0_i32_0 = arith.constant 0 : i32
    return %arg0, %c0_i32 : i32, i32
  }
  func.func @transform_2(%arg0: i32) -> (i32, i32) {
    %c0_i32 = arith.constant 0 : i32
    %c0_i32_0 = arith.constant 0 : i32
    %c0_i32_1 = arith.constant 0 : i32
    return %c0_i32, %c0_i32_0 : i32, i32
  }
}

</mosaic_0001>

<llo_original>
// kernel: tpu_custom_call.1
$region0: #{tpu_custom_call.1}
  #allocation0 [shape = 'u32[]', space=smem, size = 0x4, offset = 0x4, fixed_abs, tag = 'smem constant byte address 0x4 - core index']
  #allocation1 [shape = 'u32[144,128]{1,0:T(1,128)}', space=vmem, size = 0x12000, scoped, tag = 'internal scratch']
  #allocation2 [shape = 'f32[8,32]{1,0:T(8,128)}', space=vmem, size = 0x1000, scoped, tag = 'scratch operand']
  %s0 = inlined_call_operand.hbm [shape: f32[8,32], index: 0, kind: input, shape index: {}]
  %s1 = inlined_call_operand.hbm [shape: f32[8,32], index: 1, kind: input, shape index: {}]
  %s2 = inlined_call_operand.hbm [shape: f32[1,1], index: 2, kind: output, shape index: {}]
  %s3 = sld [smem:[#allocation0]]
  $region34: #{tpu_custom_call.1} parent=0
    _
  %s5 = ssub.s32 1, %s3
  %s6 = scalar_select 0, %s5, %s3
  $region1: #{tpu_custom_call.1} parent=0
    #allocation3 [shape = 'u8[4096]{0}', space=vmem, size = 0x1000, scoped, tag = 'input window, operand 0, single buffered']
    #allocation4 [shape = 's32[1]{0}', space=sflag, size = 0x4, scoped, tag = 'scoped memory for tpu_custom_call.1']
    #allocation5 [shape = 's32[1]{0}', space=sflag, size = 0x4, scoped, tag = 'scoped memory for tpu_custom_call.1']
    #allocation6 [shape = 'u8[4096]{0}', space=vmem, size = 0x1000, scoped, tag = 'input window, operand 1, single buffered']
    #allocation7 [shape = 's32[1]{0}', space=sflag, size = 0x4, scoped, tag = 'scoped memory for tpu_custom_call.1']
    #allocation8 [shape = 'u8[512]{0}', space=smem, size = 0x200, scoped, tag = 'output window, operand 0, single buffered']
    %7 = vsyncpa [#allocation4], 0
    %8 = vsyncpa [#allocation7], 0
    %9 = vsyncpa [#allocation5], 0
    // Predicated region
    $region2: #{tpu_custom_call.1} parent=1 // pred_check
      _
    $region3: #{tpu_custom_call.1} parent=1 // pred_check_branch
      %11 = sbr.rel (0) target = $region5
    $region4: #{tpu_custom_call.1} parent=1 // pred_region
      %s13 = ssub.s32 128, 128
      %14 = vsyncadd [#allocation4], %s13
      %s16 = sshll.u32 [#allocation3], 4
      %s17 = int_to_ptr.vmem [resolvable:$true] %s16
      %19 = dma.hbm_to_vmem [thread:$0]  %s0, 128, %s17, [#allocation4]
    $region5: #{tpu_custom_call.1} parent=1 // pred_fallthru
      _
    // Predicated region
    $region6: #{tpu_custom_call.1} parent=1 // pred_check
      _
    $region7: #{tpu_custom_call.1} parent=1 // pred_check_branch
      %21 = sbr.rel (0) target = $region9
    $region8: #{tpu_custom_call.1} parent=1 // pred_region
      %s23 = ssub.s32 128, 128
      %24 = vsyncadd [#allocation7], %s23
      %s26 = sshll.u32 [#allocation6], 4
      %s27 = int_to_ptr.vmem [resolvable:$true] %s26
      %29 = dma.hbm_to_vmem [thread:$0]  %s1, 128, %s27, [#allocation7]
    $region9: #{tpu_custom_call.1} parent=1 // pred_fallthru
      _
    // Predicated region
    $region10: #{tpu_custom_call.1} parent=1 // pred_check
      _
    $region11: #{tpu_custom_call.1} parent=1 // pred_check_branch
      %31 = sbr.rel (0) target = $region13
    $region12: #{tpu_custom_call.1} parent=1 // pred_region
      %32 = dma.done [#allocation4], 128
    $region13: #{tpu_custom_call.1} parent=1 // pred_fallthru
      _
    // Predicated region
    $region14: #{tpu_custom_call.1} parent=1 // pred_check
      _
    $region15: #{tpu_custom_call.1} parent=1 // pred_check_branch
      %34 = sbr.rel (0) target = $region17
    $region16: #{tpu_custom_call.1} parent=1 // pred_region
      %35 = dma.done [#allocation7], 128
    $region17: #{tpu_custom_call.1} parent=1 // pred_fallthru
      _
    %p36 = scmp.eq.s32.totalorder 0, 0
    // Predicated region
    $region18: #{tpu_custom_call.1} parent=1 // pred_check
      %p37 = pneg %p36
    $region19: #{tpu_custom_call.1} parent=1 // pred_check_branch
      %39 = sbr.rel (%p37) target = $region21
    $region20: #{tpu_custom_call.1} parent=1 // pred_region
      %vm40 = vcmask 261120
      %41 = vst.msk [vmem:[#allocation2] sm:$0xff] %vm40, 0.0
    $region21: #{tpu_custom_call.1} parent=1 // pred_fallthru
      _
    %v42 = vld [vmem:[#allocation3] sm:$0xff]
    %v43 = vld [vmem:[#allocation6] sm:$0xff]
    %v44 = vmax.f32 %v42, 1e-08
    %v45 = vmin.f32 %v44, 1.0
    %v46 = vlog2.pop %v45
    %v47 = vmul.f32 %v46, 0.6931472
    %v48 = vmul.f32 %v43, %v47
    %v49 = vsub.f32 0.0, %v48
    %v50 = vand.u32 2147483647, %v43
    %vm51 = vcmask 261120
    %v52 = vsel %vm51, %v50, 0.0
    %53 = vadd.xlane.f32.xlu0 %v52
    %v54 = vpop.xlane.xlu0 %53
    %v55 = vmax.f32 %v54, 1e-12
    %v56 = vrcp.pop %v55
    %v57 = vmul.f32 1.0, %v56
    %v58 = vmul.f32 %v43, %v57
    %v59 = vmax.f32 %v58, 1e-08
    %v60 = vmin.f32 %v59, 1.0
    %v61 = vlog2.pop %v60
    %v62 = vmul.f32 %v61, 0.6931472
    %v63 = vmul.f32 %v42, %v62
    %v64 = vsub.f32 %v49, %v63
    %v65 = vld [vmem:[#allocation2] sm:$0xff]
    %v66 = vadd.f32 %v64, 0.0
    %v67 = vadd.f32 %v65, %v66
    %68 = vst.msk [vmem:[#allocation2] sm:$0xff] %vm51, %v67
    // Predicated region
    $region22: #{tpu_custom_call.1} parent=1 // pred_check
      %p69 = pneg %p36
    $region23: #{tpu_custom_call.1} parent=1 // pred_check_branch
      %71 = sbr.rel (%p69) target = $region25
    $region24: #{tpu_custom_call.1} parent=1 // pred_region
      %v72 = vld [vmem:[#allocation2] sm:$0xff]
      %v73 = vsel %vm51, %v72, 0.0
      %74 = vadd.xlane.f32.xlu0 %v73
      %v75 = vpop.xlane.xlu0 %74
      %v76 = vrot.slane %v75, 4
      %v77 = vadd.f32 %v75, %v76
      %v78 = vrot.slane %v77, 2
      %v79 = vadd.f32 %v77, %v78
      %v80 = vrot.slane %v79, 1
      %v81 = vadd.f32 %v79, %v80
      %s82 = vtos %v81
      %s83 = smul.f32 %s82, 0.125
      %s84 = scalar_lea.smem [#allocation8], 0
      %85 = sst [smem:[%s84]] %s83
    $region25: #{tpu_custom_call.1} parent=1 // pred_fallthru
      _
    // Predicated region
    $region26: #{tpu_custom_call.1} parent=1 // pred_check
      _
    $region27: #{tpu_custom_call.1} parent=1 // pred_check_branch
      %87 = sbr.rel (0) target = $region29
    $region28: #{tpu_custom_call.1} parent=1 // pred_region
      %s89 = ssub.s32 16, 16
      %90 = vsyncadd [#allocation5], %s89
      %93 = dma.smem_to_hbm [#allocation8], 16, %s2, [#allocation5]
    $region29: #{tpu_custom_call.1} parent=1 // pred_fallthru
      _
    // Predicated region
    $region30: #{tpu_custom_call.1} parent=1 // pred_check
      _
    $region31: #{tpu_custom_call.1} parent=1 // pred_check_branch
      %95 = sbr.rel (0) target = $region33
    $region32: #{tpu_custom_call.1} parent=1 // pred_region
      %96 = dma.done [#allocation5], 16
    $region33: #{tpu_custom_call.1} parent=1 // pred_fallthru
      _
    %97 = sfence
    %98 = vsyncpa [#allocation4], 1
    %99 = vsyncpa [#allocation7], 1
    %100 = vsyncpa [#allocation5], 1

</llo_original>
